<compile_context>
chip_gen: v5e
topology: v5e:2x2
jax: 0.10.0
libtpu: 0.0.40
codegen_flags: <defaults>
</compile_context>

<pallas_src>
import numpy as np

import jax
import jax.numpy as jnp
from jax.experimental import pallas as pl
from jax.experimental.pallas import tpu as pltpu

SINUSOIDAL_TIME_EMBED_MAX_T = 500

_W2_BLOCK_VMEM_BUDGET = 8 * 1024 * 1024   # bytes allowed for one resident bf16 W2 block


def _round_up(x, m):
    return ((x + m - 1) // m) * m


def _time_embed_kernel(t_ref, trig_ref, w1_ref, b1_ref, w2_ref, b2_ref, o_ref):
    # t_ref:    (TB, 1)   batch tile of scalar timesteps (f32)
    # trig_ref: (2, C4)   row 0 = freqs duplicated [f0..f_{h-1}, f0..f_{h-1}]
    #                     row 1 = phase offsets    [0]*h + [pi/2]*h
    # w1_ref:   (C4, C)   bf16      b1_ref: (1, C)   f32
    # w2_ref:   (C, BN)   bf16      b2_ref: (1, BN)  f32
    # o_ref:    (TB, BN)  f32
    freqs = trig_ref[0:1, :]                     # (1, C4)
    offs = trig_ref[1:2, :]                      # (1, C4)

    # sin(t*f) for the first half_dim lanes, sin(t*f + pi/2) == cos(t*f) for the
    # second half -> torch.cat([sin, cos]) with a single EUP pass per lane.
    emb = jnp.sin(t_ref[...] * freqs + offs)     # (TB, C4) f32

    # bf16 MXU operands, f32 accumulation; bias adds / activation stay f32.
    h = jnp.dot(emb.astype(w1_ref.dtype), w1_ref[...],
                preferred_element_type=jnp.float32) + b1_ref[...]
    h = jnp.maximum(h, 0.01 * h)                 # LeakyReLU(0.01): mul + vmax
    out = jnp.dot(h.astype(w2_ref.dtype), w2_ref[...],
                  preferred_element_type=jnp.float32) + b2_ref[...]
    o_ref[...] = out.astype(o_ref.dtype)


def _pick_block_n(n_channels, grid_b):
    """Output/N-dim block width for W2 / b2 / out (multiple of 128, or full width)."""
    if n_channels % 256 != 0:
        return n_channels                        # can't split into lane-aligned halves
    need_split_for_cores = grid_b < 2            # v7x: give both TensorCores work
    need_split_for_vmem = n_channels * n_channels * 2 > _W2_BLOCK_VMEM_BUDGET
    if not (need_split_for_cores or need_split_for_vmem):
        return n_channels
    bn = n_channels // 2
    while bn % 256 == 0 and n_channels * bn * 2 > _W2_BLOCK_VMEM_BUDGET:
        bn //= 2
    return max(bn, 128)


def sinusoidal_time_embedding(t, w1, b1, w2, b2, n_channels,
                              block_b=512, block_n=None):
    """t: (B, 1) float32 -> (B, n_channels) float32.

    w1: (n_channels//4, n_channels), w2: (n_channels, n_channels) (pre-transposed).
    b1, b2: (n_channels,).

    block_b: batch rows per grid step.  For real workloads keep it a multiple of 8
    and >= 128 (v5e) / >= 256 (v6e/v7x) so the MXU M dim is filled and the
    ~0.35us/step overhead is amortized; tiny values (e.g. 8) are for testing only.
    """
    if n_channels < 16 or n_channels % 8 != 0:
        # half_dim = n_channels // 8 must be >= 2 (scale = log(500)/(half_dim-1)).
        raise ValueError("n_channels must be a multiple of 8 and >= 16")

    B = t.shape[0]
    half_dim = n_channels // 8
    C4 = n_channels // 4

    # Fixed batch tile (multiple of 8); the last block may be ragged -- Pallas
    # clips it (padded reads, dropped out-of-bounds writes), so B need not divide
    # tb and the grid keeps multiple steps for pipelining / v7x batch sharding.
    tb = _round_up(min(block_b, _round_up(B, 8)), 8)
    grid_b = pl.cdiv(B, tb)

    # Output/N split: feeds v7x's second TensorCore when grid_b == 1 and keeps the
    # resident W2 block within budget at large n_channels.
    bn = block_n if block_n is not None else _pick_block_n(n_channels, grid_b)
    if bn != n_channels and bn % 128 != 0:
        raise ValueError("block_n must be a multiple of 128 or equal n_channels")
    grid_n = pl.cdiv(n_channels, bn)

    # Host-side constant setup (glue): frequencies duplicated for the sin/cos lane
    # halves plus the +pi/2 phase row that turns the cos half into sin.
    scale = np.log(SINUSOIDAL_TIME_EMBED_MAX_T) / (half_dim - 1)
    freqs = np.exp(np.arange(half_dim, dtype=np.float32) * -scale)
    trig = jnp.asarray(
        np.stack([np.concatenate([freqs, freqs]),
                  np.concatenate([np.zeros(half_dim, np.float32),
                                  np.full(half_dim, np.pi / 2, np.float32)])],
                 axis=0), dtype=jnp.float32)                          # (2, C4)

    # bf16 MXU operands (f32 accumulation in-kernel); biases stay f32.
    w1_bf16 = w1.astype(jnp.bfloat16)
    w2_bf16 = w2.astype(jnp.bfloat16)
    b1_2d = b1.reshape(1, n_channels).astype(jnp.float32)
    b2_2d = b2.reshape(1, n_channels).astype(jnp.float32)

    # Rough VMEM footprint (double-buffered blocks + f32 intermediates) so large
    # n_channels doesn't trip the default scoped limit (v7x default: 32 MiB).
    vmem_est = 2 * (tb * 4 + tb * bn * 4                        # t / out blocks
                    + 2 * C4 * 4                                # trig
                    + C4 * n_channels * 2 + n_channels * 4      # W1, b1
                    + n_channels * bn * 2 + bn * 4)             # W2 block, b2 block
    vmem_est += tb * C4 * 4 + 2 * tb * n_channels * 4           # emb / h intermediates
    vmem_limit = int(min(max(2 * vmem_est, 32 * 1024 * 1024), 56 * 1024 * 1024))

    # Constant index_maps keep trig/W1/b1 (and, within a batch step, the current
    # W2/b2 column block) VMEM-resident; only t and the output stream per step.
    # TODO(synk): single-buffer the constant blocks via pipeline_mode=pl.Buffered(1)
    # once that path is confirmed in the target Mosaic lowering; halves their
    # resident VMEM (matters most on v7x's 64 MiB / v5e's 16 MiB scoped default).
    const = lambda shape: pl.BlockSpec(shape, lambda i, j: (0, 0))

    out = pl.pallas_call(
        _time_embed_kernel,
        out_shape=jax.ShapeDtypeStruct((B, n_channels), jnp.float32),
        grid=(grid_b, grid_n),
        in_specs=[
            pl.BlockSpec((tb, 1), lambda i, j: (i, 0)),            # t (streams)
            const((2, C4)),                                        # freqs + offsets
            const((C4, n_channels)),                               # W1
            const((1, n_channels)),                                # b1
            pl.BlockSpec((n_channels, bn), lambda i, j: (0, j)),   # W2 column block
            pl.BlockSpec((1, bn), lambda i, j: (0, j)),            # b2 column block
        ],
        out_specs=pl.BlockSpec((tb, bn), lambda i, j: (i, j)),
        compiler_params=pltpu.CompilerParams(
            # Every grid point writes a disjoint output block -> both axes are
            # parallel; lets v7x shard (batch, out-cols) over its 2 TensorCores
            # (no-op on single-TC v5e/v6e).
            dimension_semantics=("parallel", "parallel"),
            vmem_limit_bytes=vmem_limit,
        ),
    )(t, trig, w1_bf16, b1_2d, w2_bf16, b2_2d)
    # TODO(synk): at deployment scale (tiny B, C=128) this op is pallas_call
    # launch-overhead bound on every TPU generation; the real win is fusing it into
    # the downstream GNN consumer kernel's prologue (or batching many timestep
    # embeddings into one call), not further tile tuning.
    return out


def _reference(t, w1, b1, w2, b2, n_channels):
    """Pure-JAX reference matching the PyTorch module, using the same bf16 MXU
    operand casts as the kernel (accumulation stays f32)."""
    half_dim = n_channels // 8
    scale = np.log(SINUSOIDAL_TIME_EMBED_MAX_T) / (half_dim - 1)
    freqs = jnp.asarray(np.exp(np.arange(half_dim, dtype=np.float32) * -scale))
    x = t * freqs[None, :]                                          # (B, half_dim)
    emb = jnp.concatenate([jnp.sin(x), jnp.cos(x)], axis=-1)        # (B, C4)
    h = jnp.dot(emb.astype(jnp.bfloat16), w1.astype(jnp.bfloat16),
                preferred_element_type=jnp.float32) + b1
    h = jnp.where(h > 0, h, 0.01 * h)
    return jnp.dot(h.astype(jnp.bfloat16), w2.astype(jnp.bfloat16),
                   preferred_element_type=jnp.float32) + b2


if __name__ == "__main__":
    key = jax.random.PRNGKey(0)

    def make_case(k, B, n_channels):
        C4 = n_channels // 4
        k_t, k_w1, k_b1, k_w2, k_b2 = jax.random.split(k, 5)
        t = jax.random.uniform(k_t, (B, 1), jnp.float32, 0.0, 500.0)
        w1 = jax.random.normal(k_w1, (C4, n_channels), jnp.float32) * 0.1
        b1 = jax.random.normal(k_b1, (n_channels,), jnp.float32) * 0.1
        w2 = jax.random.normal(k_w2, (n_channels, n_channels), jnp.float32) * 0.1
        b2 = jax.random.normal(k_b2, (n_channels,), jnp.float32) * 0.1
        return t, w1, b1, w2, b2

    k1, k2 = jax.random.split(key)

    # Case 1: ragged batch. B=12 with block_b=8 -> 2-step batch grid, last block
    # clipped by Pallas (this is the path the old `tb = B` fallback destroyed).
    n_channels = 128
    t, w1, b1, w2, b2 = make_case(k1, 12, n_channels)
    out = sinusoidal_time_embedding(t, w1, b1, w2, b2, n_channels, block_b=8)
    out = jax.block_until_ready(out)
    ref = _reference(t, w1, b1, w2, b2, n_channels)
    # Tolerance covers the sin(x+pi/2)==cos(x) argument-rounding drift plus
    # bf16 operand rounding (accumulation is f32 in both kernel and reference).
    np.testing.assert_allclose(np.asarray(out), np.asarray(ref), rtol=1e-2, atol=1e-2)

    # Case 2: tiny batch, n_channels=256 -> batch grid of 1, auto N split kicks in
    # (grid = (1, 2)), exercising the v7x two-TensorCore output-column path.
    n_channels = 256
    t, w1, b1, w2, b2 = make_case(k2, 8, n_channels)
    out = sinusoidal_time_embedding(t, w1, b1, w2, b2, n_channels, block_b=8)
    out = jax.block_until_ready(out)
    ref = _reference(t, w1, b1, w2, b2, n_channels)
    np.testing.assert_allclose(np.asarray(out), np.asarray(ref), rtol=1e-2, atol=1e-2)

    print("KERNEL_OK")
</pallas_src>

<mosaic_0001>
module attributes {stable_mosaic.version = 11 : i64} {
  func.func @_time_embed_kernel(%arg0: i32, %arg1: i32, %arg2: memref<8x1xf32, #tpu.memory_space<vmem>>, %arg3: memref<2x32xf32, #tpu.memory_space<vmem>>, %arg4: memref<32x128xbf16, #tpu.memory_space<vmem>>, %arg5: memref<1x128xf32, #tpu.memory_space<vmem>>, %arg6: memref<128x128xbf16, #tpu.memory_space<vmem>>, %arg7: memref<1x128xf32, #tpu.memory_space<vmem>>, %arg8: memref<8x128xf32, #tpu.memory_space<vmem>>) attributes {dimension_semantics = [#tpu.dimension_semantics<parallel>, #tpu.dimension_semantics<parallel>], iteration_bounds = array<i64: 2, 1>, scalar_prefetch = 0 : i64, scratch_operands = 0 : i64, tpu.core_type = #tpu.core_type<tc>, window_params = [{transform_indices = @transform_0, window_bounds = array<i64: 8, 1>}, {pipeline_mode = #tpu.pipeline_mode<synchronous>, transform_indices = @transform_1, window_bounds = array<i64: 2, 32>}, {pipeline_mode = #tpu.pipeline_mode<synchronous>, transform_indices = @transform_2, window_bounds = array<i64: 32, 128>}, {pipeline_mode = #tpu.pipeline_mode<synchronous>, transform_indices = @transform_3, window_bounds = array<i64: 1, 128>}, {transform_indices = @transform_4, window_bounds = array<i64: 128, 128>}, {transform_indices = @transform_5, window_bounds = array<i64: 1, 128>}, {transform_indices = @transform_6, window_bounds = array<i64: 8, 128>}]} {
    %c0 = arith.constant 0 : index
    %c0_0 = arith.constant 0 : index
    %0 = vector.load %arg3[%c0, %c0_0] : memref<2x32xf32, #tpu.memory_space<vmem>>, vector<1x32xf32>
    %c1 = arith.constant 1 : index
    %c0_1 = arith.constant 0 : index
    %1 = vector.load %arg3[%c1, %c0_1] : memref<2x32xf32, #tpu.memory_space<vmem>>, vector<1x32xf32>
    %c0_2 = arith.constant 0 : index
    %c0_3 = arith.constant 0 : index
    %2 = vector.load %arg2[%c0_2, %c0_3] : memref<8x1xf32, #tpu.memory_space<vmem>>, vector<8x1xf32>
    %3 = vector.broadcast %2 : vector<8x1xf32> to vector<8x32xf32>
    %4 = vector.broadcast %0 : vector<1x32xf32> to vector<8x32xf32>
    %5 = arith.mulf %3, %4 : vector<8x32xf32>
    %6 = vector.broadcast %1 : vector<1x32xf32> to vector<8x32xf32>
    %7 = arith.addf %5, %6 : vector<8x32xf32>
    %8 = math.sin %7 : vector<8x32xf32>
    %9 = arith.truncf %8 : vector<8x32xf32> to vector<8x32xbf16>
    %c0_4 = arith.constant 0 : index
    %c0_5 = arith.constant 0 : index
    %10 = vector.load %arg4[%c0_4, %c0_5] : memref<32x128xbf16, #tpu.memory_space<vmem>>, vector<32x128xbf16>
    %cst = arith.constant dense<0.000000e+00> : vector<8x128xf32>
    %11 = tpu.matmul %9, %10, %cst {dimension_numbers = #tpu.dot_dimension_numbers<[1], [0], [0], [1], [0, 0, 1, 1], [], []>} : vector<8x32xbf16>, vector<32x128xbf16>, vector<8x128xf32> -> vector<8x128xf32>
    %c0_6 = arith.constant 0 : index
    %c0_7 = arith.constant 0 : index
    %12 = vector.load %arg5[%c0_6, %c0_7] : memref<1x128xf32, #tpu.memory_space<vmem>>, vector<1x128xf32>
    %13 = vector.broadcast %12 : vector<1x128xf32> to vector<8x128xf32>
    %14 = arith.addf %11, %13 : vector<8x128xf32>
    %cst_8 = arith.constant 0.00999999977 : f32
    %15 = vector.broadcast %cst_8 : f32 to vector<8x128xf32>
    %16 = arith.mulf %15, %14 : vector<8x128xf32>
    %17 = arith.maximumf %14, %16 : vector<8x128xf32>
    %18 = arith.truncf %17 : vector<8x128xf32> to vector<8x128xbf16>
    %c0_9 = arith.constant 0 : index
    %c0_10 = arith.constant 0 : index
    %19 = vector.load %arg6[%c0_9, %c0_10] : memref<128x128xbf16, #tpu.memory_space<vmem>>, vector<128x128xbf16>
    %cst_11 = arith.constant dense<0.000000e+00> : vector<8x128xf32>
    %20 = tpu.matmul %18, %19, %cst_11 {dimension_numbers = #tpu.dot_dimension_numbers<[1], [0], [0], [1], [0, 0, 1, 1], [], []>} : vector<8x128xbf16>, vector<128x128xbf16>, vector<8x128xf32> -> vector<8x128xf32>
    %c0_12 = arith.constant 0 : index
    %c0_13 = arith.constant 0 : index
    %21 = vector.load %arg7[%c0_12, %c0_13] : memref<1x128xf32, #tpu.memory_space<vmem>>, vector<1x128xf32>
    %22 = vector.broadcast %21 : vector<1x128xf32> to vector<8x128xf32>
    %23 = arith.addf %20, %22 : vector<8x128xf32>
    %c0_14 = arith.constant 0 : index
    %c0_15 = arith.constant 0 : index
    %24 = vector.load %arg8[%c0_14, %c0_15] : memref<8x128xf32, #tpu.memory_space<vmem>>, vector<8x128xf32>
    tpu.vector_store %arg8[%c0_14, %c0_15], %23 {strides = array<i32>} : memref<8x128xf32, #tpu.memory_space<vmem>>, vector<8x128xf32>,
    return
  }
  func.func @transform_0(%arg0: i32, %arg1: i32) -> (i32, i32) {
    %c0_i32 = arith.constant 0 : i32
    %c0_i32_0 = arith.constant 0 : i32
    return %arg0, %c0_i32 : i32, i32
  }
  func.func @transform_1(%arg0: i32, %arg1: i32) -> (i32, i32) {
    %c0_i32 = arith.constant 0 : i32
    %c0_i32_0 = arith.constant 0 : i32
    %c0_i32_1 = arith.constant 0 : i32
    return %c0_i32, %c0_i32_0 : i32, i32
  }
  func.func @transform_2(%arg0: i32, %arg1: i32) -> (i32, i32) {
    %c0_i32 = arith.constant 0 : i32
    %c0_i32_0 = arith.constant 0 : i32
    %c0_i32_1 = arith.constant 0 : i32
    return %c0_i32, %c0_i32_0 : i32, i32
  }
  func.func @transform_3(%arg0: i32, %arg1: i32) -> (i32, i32) {
    %c0_i32 = arith.constant 0 : i32
    %c0_i32_0 = arith.constant 0 : i32
    %c0_i32_1 = arith.constant 0 : i32
    return %c0_i32, %c0_i32_0 : i32, i32
  }
  func.func @transform_4(%arg0: i32, %arg1: i32) -> (i32, i32) {
    %c0_i32 = arith.constant 0 : i32
    %c0_i32_0 = arith.constant 0 : i32
    return %c0_i32, %arg1 : i32, i32
  }
  func.func @transform_5(%arg0: i32, %arg1: i32) -> (i32, i32) {
    %c0_i32 = arith.constant 0 : i32
    %c0_i32_0 = arith.constant 0 : i32
    return %c0_i32, %arg1 : i32, i32
  }
  func.func @transform_6(%arg0: i32, %arg1: i32) -> (i32, i32) {
    %c0_i32 = arith.constant 0 : i32
    return %arg0, %arg1 : i32, i32
  }
}

</mosaic_0001>

<llo_original>
// kernel: tpu_custom_call.1
$region0: #{tpu_custom_call.1}
  #allocation0 [shape = 'u32[]', space=smem, size = 0x4, offset = 0x4, fixed_abs, tag = 'smem constant byte address 0x4 - core index']
  #allocation1 [shape = 'u32[72,128]{1,0:T(1,128)}', space=vmem, size = 0x9000, scoped, tag = 'internal scratch']
  %s0 = inlined_call_operand.vmem [shape: f32[12,1], index: 0, kind: input, shape index: {}]
  %s1 = inlined_call_operand.vmem [shape: f32[2,32], index: 1, kind: input, shape index: {}]
  %s2 = inlined_call_operand.vmem [shape: bf16[32,128], index: 2, kind: input, shape index: {}]
  %s3 = inlined_call_operand.vmem [shape: f32[1,128], index: 3, kind: input, shape index: {}]
  %s4 = inlined_call_operand.hbm [shape: bf16[128,128], index: 4, kind: input, shape index: {}]
  %s5 = inlined_call_operand.vmem [shape: f32[1,128], index: 5, kind: input, shape index: {}]
  %s6 = inlined_call_operand.hbm [shape: f32[12,128], index: 6, kind: output, shape index: {}]
  %s7 = sld [smem:[#allocation0]]
  $region61: #{tpu_custom_call.1} parent=0
    _
  %s9 = ssub.s32 1, %s7
  %s10 = scalar_select 0, %s9, %s7
  $region1: #{tpu_custom_call.1} parent=0
    #allocation2 [shape = 'u8[32768]{0}', space=vmem, size = 0x8000, scoped, tag = 'input window, operand 4, single buffered']
    #allocation3 [shape = 's32[2]{0}', space=sflag, size = 0x8, scoped, tag = 'scoped memory for tpu_custom_call.1']
    #allocation4 [shape = 's32[2]{0}', space=sflag, size = 0x8, scoped, tag = 'scoped memory for tpu_custom_call.1']
    #allocation5 [shape = 'u8[8192]{0}', space=vmem, size = 0x2000, scoped, tag = 'output window, operand 0']
    %11 = vsyncpa [#allocation3], 0
    %12 = vsyncpa [#allocation4], 0
    %s13 = scalar_lea.sflag [#allocation4], 1
    %14 = vsyncpa %s13, 0
    loop: start=0, step=1, limit=4
    $region2: #{tpu_custom_call.1} parent=1 // loop_pre_header
      _
    $region3: #{tpu_custom_call.1} parent=1 // loop_header
      %s16 = sphi 0, %s20
      %p17 = scmp.ge.s32.totalorder %s16, 4
      %s23 = sphi 0, %s35
      %s24 = sphi 0, %s31
      %s25 = sphi 0, %s23
      %s26 = sphi 0, %s24
      %s27 = sphi 0, %s25
      %s28 = sphi 0, %s26
      %s38 = sphi 0, %s40
      %s41 = sphi 0, %s38
      %s42 = sphi 0, %s41
      %s58 = sphi 0, %s42
      %s62 = sphi 0, %s62
      %s64 = sphi 0, %s62
      %s65 = sphi 0, %s64
      %s79 = sphi 0, %s65
      %s83 = sphi 0, %s83
      %s85 = sphi 0, %s83
      %s86 = sphi 0, %s85
      %s100 = sphi 0, %s86
      %s104 = sphi 0, %s104
      %s106 = sphi 0, %s104
      %s107 = sphi 0, %s106
      %s121 = sphi 0, %s107
      %s127 = sphi 0, %s129
      %s130 = sphi 0, %s127
      %s131 = sphi 0, %s130
      %s147 = sphi 0, %s131
      %s153 = sphi 0, %s155
      %s156 = sphi 0, %s153
      %s157 = sphi 0, %s156
      %s173 = sphi 0, %s157
      %s181 = sphi 0, %s183
      %s184 = sphi 0, %s181
      %s185 = sphi 0, %s184
      %s201 = sphi 0, %s185
    $region4: #{tpu_custom_call.1} parent=1 // loop_header_branch
      %19 = sbr.rel (%p17) target = $region8
    $region5: #{tpu_custom_call.1} parent=1 // loop_body
      %s21 = ssub.s32 %s16, 1
      %s22 = ssub.s32 %s16, 2
      %s29 = sadd.s32 1, %s24
      %p30 = scmp.ge.s32.totalorder %s29, 1
      %s31 = scalar_select %p30, 0, %s29
      %s32 = sadd.s32 1, %s23
      %s33 = scalar_select %p30, %s32, %s23
      %p34 = scmp.ge.s32.totalorder %s33, 2
      %s35 = scalar_select %p34, 0, %s33
      %s36 = ssub.s32 %s23, %s35
      %p37 = scmp.eq.s32.totalorder %s36, 0
      %s39 = sadd.s32 %s38, 1
      %s40 = scalar_select %p37, %s38, %s39
      %p43 = pneg %p37
      %p44 = scmp.eq.s32.totalorder %s16, 1
      %p45 = por %p43, %p44
      %p46 = scmp.ne.s32.totalorder %s38, %s41
      %p47 = scmp.eq.s32.totalorder %s16, 0
      %p48 = por %p46, %p47
      %p49 = scmp.ne.s32.totalorder %s38, %s41
      %p50 = scmp.eq.s32.totalorder %s21, 1
      %p51 = por %p49, %p50
      %p52 = scmp.ne.s32.totalorder %s41, %s42
      %p53 = scmp.eq.s32.totalorder %s21, 0
      %p54 = por %p52, %p53
      %p55 = scmp.ne.s32.totalorder %s41, %s42
      %p56 = scmp.eq.s32.totalorder %s22, 1
      %p57 = por %p55, %p56
      %p59 = scmp.ne.s32.totalorder %s42, %s58
      %p60 = scmp.eq.s32.totalorder %s22, 0
      %p61 = por %p59, %p60
      %s63 = sadd.s32 %s62, 1
      %p66 = scmp.eq.s32.totalorder %s16, 1
      %p67 = scmp.ne.s32.totalorder %s62, %s64
      %p68 = scmp.eq.s32.totalorder %s16, 0
      %p69 = por %p67, %p68
      %p70 = scmp.ne.s32.totalorder %s62, %s64
      %p71 = scmp.eq.s32.totalorder %s21, 1
      %p72 = por %p70, %p71
      %p73 = scmp.ne.s32.totalorder %s64, %s65
      %p74 = scmp.eq.s32.totalorder %s21, 0
      %p75 = por %p73, %p74
      %p76 = scmp.ne.s32.totalorder %s64, %s65
      %p77 = scmp.eq.s32.totalorder %s22, 1
      %p78 = por %p76, %p77
      %p80 = scmp.ne.s32.totalorder %s65, %s79
      %p81 = scmp.eq.s32.totalorder %s22, 0
      %p82 = por %p80, %p81
      %s84 = sadd.s32 %s83, 1
      %p87 = scmp.eq.s32.totalorder %s16, 1
      %p88 = scmp.ne.s32.totalorder %s83, %s85
      %p89 = scmp.eq.s32.totalorder %s16, 0
      %p90 = por %p88, %p89
      %p91 = scmp.ne.s32.totalorder %s83, %s85
      %p92 = scmp.eq.s32.totalorder %s21, 1
      %p93 = por %p91, %p92
      %p94 = scmp.ne.s32.totalorder %s85, %s86
      %p95 = scmp.eq.s32.totalorder %s21, 0
      %p96 = por %p94, %p95
      %p97 = scmp.ne.s32.totalorder %s85, %s86
      %p98 = scmp.eq.s32.totalorder %s22, 1
      %p99 = por %p97, %p98
      %p101 = scmp.ne.s32.totalorder %s86, %s100
      %p102 = scmp.eq.s32.totalorder %s22, 0
      %p103 = por %p101, %p102
      %s105 = sadd.s32 %s104, 1
      %p108 = scmp.eq.s32.totalorder %s16, 1
      %p109 = scmp.ne.s32.totalorder %s104, %s106
      %p110 = scmp.eq.s32.totalorder %s16, 0
      %p111 = por %p109, %p110
      %p112 = scmp.ne.s32.totalorder %s104, %s106
      %p113 = scmp.eq.s32.totalorder %s21, 1
      %p114 = por %p112, %p113
      %p115 = scmp.ne.s32.totalorder %s106, %s107
      %p116 = scmp.eq.s32.totalorder %s21, 0
      %p117 = por %p115, %p116
      %p118 = scmp.ne.s32.totalorder %s106, %s107
      %p119 = scmp.eq.s32.totalorder %s22, 1
      %p120 = por %p118, %p119
      %p122 = scmp.ne.s32.totalorder %s107, %s121
      %p123 = scmp.eq.s32.totalorder %s22, 0
      %p124 = por %p122, %p123
      %s125 = ssub.s32 %s24, %s31
      %p126 = scmp.eq.s32.totalorder %s125, 0
      %s128 = sadd.s32 %s127, 1
      %s129 = scalar_select %p126, %s127, %s128
      %p132 = pneg %p126
      %p133 = scmp.eq.s32.totalorder %s16, 1
      %p134 = por %p132, %p133
      %p135 = scmp.ne.s32.totalorder %s127, %s130
      %p136 = scmp.eq.s32.totalorder %s16, 0
      %p137 = por %p135, %p136
      %p138 = scmp.ne.s32.totalorder %s127, %s130
      %p139 = scmp.eq.s32.totalorder %s21, 1
      %p140 = por %p138, %p139
      %p141 = scmp.ne.s32.totalorder %s130, %s131
      %p142 = scmp.eq.s32.totalorder %s21, 0
      %p143 = por %p141, %p142
      %p144 = scmp.ne.s32.totalorder %s130, %s131
      %p145 = scmp.eq.s32.totalorder %s22, 1
      %p146 = por %p144, %p145
      %p148 = scmp.ne.s32.totalorder %s131, %s147
      %p149 = scmp.eq.s32.totalorder %s22, 0
      %p150 = por %p148, %p149
      %s151 = ssub.s32 %s24, %s31
      %p152 = scmp.eq.s32.totalorder %s151, 0
      %s154 = sadd.s32 %s153, 1
      %s155 = scalar_select %p152, %s153, %s154
      %p158 = pneg %p152
      %p159 = scmp.eq.s32.totalorder %s16, 1
      %p160 = por %p158, %p159
      %p161 = scmp.ne.s32.totalorder %s153, %s156
      %p162 = scmp.eq.s32.totalorder %s16, 0
      %p163 = por %p161, %p162
      %p164 = scmp.ne.s32.totalorder %s153, %s156
      %p165 = scmp.eq.s32.totalorder %s21, 1
      %p166 = por %p164, %p165
      %p167 = scmp.ne.s32.totalorder %s156, %s157
      %p168 = scmp.eq.s32.totalorder %s21, 0
      %p169 = por %p167, %p168
      %p170 = scmp.ne.s32.totalorder %s156, %s157
      %p171 = scmp.eq.s32.totalorder %s22, 1
      %p172 = por %p170, %p171
      %p174 = scmp.ne.s32.totalorder %s157, %s173
      %p175 = scmp.eq.s32.totalorder %s22, 0
      %p176 = por %p174, %p175
      %s177 = ssub.s32 %s23, %s35
      %s178 = ssub.s32 %s24, %s31
      %s179 = sor.u32 %s177, %s178
      %p180 = scmp.eq.s32.totalorder %s179, 0
      %s182 = sadd.s32 %s181, 1
      %s183 = scalar_select %p180, %s181, %s182
      %p186 = pneg %p180
      %p187 = scmp.eq.s32.totalorder %s16, 1
      %p188 = por %p186, %p187
      %p189 = scmp.ne.s32.totalorder %s181, %s184
      %p190 = scmp.eq.s32.totalorder %s16, 0
      %p191 = por %p189, %p190
      %p192 = scmp.ne.s32.totalorder %s181, %s184
      %p193 = scmp.eq.s32.totalorder %s21, 1
      %p194 = por %p192, %p193
      %p195 = scmp.ne.s32.totalorder %s184, %s185
      %p196 = scmp.eq.s32.totalorder %s21, 0
      %p197 = por %p195, %p196
      %p198 = scmp.ne.s32.totalorder %s184, %s185
      %p199 = scmp.eq.s32.totalorder %s22, 1
      %p200 = por %p198, %p199
      %p202 = scmp.ne.s32.totalorder %s185, %s201
      %p203 = scmp.eq.s32.totalorder %s22, 0
      %p204 = por %p202, %p203
      %p205 = scmp.le.s32.totalorder 1, %s16
      %p206 = scmp.lt.s32.totalorder %s16, 3
      %p207 = pnand %p205, %p206
      %p208 = pneg %p207
      // Predicated region
      $region9: #{tpu_custom_call.1} parent=5 // pred_check
        _
      $region10: #{tpu_custom_call.1} parent=5 // pred_check_branch
        %210 = sbr.rel (%p207) target = $region12
      $region11: #{tpu_custom_call.1} parent=5 // pred_region
        %s211 = ssub.s32 %s16, 1
        // Predicated region
        $region13: #{tpu_custom_call.1} parent=11 // pred_check
          %p212 = pneg %p75
        $region14: #{tpu_custom_call.1} parent=11 // pred_check_branch
          %214 = sbr.rel (%p212) target = $region16
        $region15: #{tpu_custom_call.1} parent=11 // pred_region
          _
        $region16: #{tpu_custom_call.1} parent=11 // pred_fallthru
          _
        // Predicated region
        $region17: #{tpu_custom_call.1} parent=11 // pred_check
          %p215 = pneg %p96
        $region18: #{tpu_custom_call.1} parent=11 // pred_check_branch
          %217 = sbr.rel (%p215) target = $region20
        $region19: #{tpu_custom_call.1} parent=11 // pred_region
          _
        $region20: #{tpu_custom_call.1} parent=11 // pred_fallthru
          _
        // Predicated region
        $region21: #{tpu_custom_call.1} parent=11 // pred_check
          %p218 = pneg %p117
        $region22: #{tpu_custom_call.1} parent=11 // pred_check_branch
          %220 = sbr.rel (%p218) target = $region24
        $region23: #{tpu_custom_call.1} parent=11 // pred_region
          _
        $region24: #{tpu_custom_call.1} parent=11 // pred_fallthru
          _
        // Predicated region
        $region25: #{tpu_custom_call.1} parent=11 // pred_check
          %p221 = pneg %p143
        $region26: #{tpu_custom_call.1} parent=11 // pred_check_branch
          %223 = sbr.rel (%p221) target = $region28
        $region27: #{tpu_custom_call.1} parent=11 // pred_region
          %225 = vsyncadd [#allocation3], 0
          %s226 = smul.addr %s26, 4
          %s227 = scalar_lea.hbm %s4, %s226
          %s228 = sshll.u32 %s227, 4
          %s229 = int_to_ptr.hbm [resolvable:$true] %s228
          %s230 = sshll.u32 [#allocation2], 4
          %s231 = int_to_ptr.vmem [resolvable:$true] %s230
          %236 = dma.hbm_to_vmem [thread:$0]  %s229, 1024, %s231, [#allocation3], 64, 64, 4
        $region28: #{tpu_custom_call.1} parent=11 // pred_fallthru
          _
        // Predicated region
        $region29: #{tpu_custom_call.1} parent=11 // pred_check
          %p237 = pneg %p169
        $region30: #{tpu_custom_call.1} parent=11 // pred_check_branch
          %239 = sbr.rel (%p237) target = $region32
        $region31: #{tpu_custom_call.1} parent=11 // pred_region
          %p240 = scmp.lt.s32.totalorder %s26, 0
          %s241 = scalar_select %p240, %s26, 0
          %s242 = scalar_lea.vmem %s5, %s241
        $region32: #{tpu_custom_call.1} parent=11 // pred_fallthru
          _
      $region12: #{tpu_custom_call.1} parent=5 // pred_fallthru
        _
      %p243 = scmp.lt.s32.totalorder %s16, 2
      // Predicated region
      $region33: #{tpu_custom_call.1} parent=5 // pred_check
        %p244 = pneg %p243
      $region34: #{tpu_custom_call.1} parent=5 // pred_check_branch
        %246 = sbr.rel (%p244) target = $region36
      $region35: #{tpu_custom_call.1} parent=5 // pred_region
        // Predicated region
        $region37: #{tpu_custom_call.1} parent=35 // pred_check
          %p247 = pneg %p48
        $region38: #{tpu_custom_call.1} parent=35 // pred_check_branch
          %249 = sbr.rel (%p247) target = $region40
        $region39: #{tpu_custom_call.1} parent=35 // pred_region
          %p250 = scmp.lt.s32.totalorder %s23, 1
          %s251 = scalar_select %p250, %s23, 1
          %s252 = smul.addr %s251, 8
          %s253 = scalar_lea.vmem %s0, %s252
        $region40: #{tpu_custom_call.1} parent=35 // pred_fallthru
          _
      $region36: #{tpu_custom_call.1} parent=5 // pred_fallthru
        _
      %p254 = scmp.le.s32.totalorder 1, %s16
      %p255 = scmp.lt.s32.totalorder %s16, 3
      %p256 = pnand %p254, %p255
      %p257 = pneg %p256
      // Predicated region
      $region41: #{tpu_custom_call.1} parent=5 // pred_check
        _
      $region42: #{tpu_custom_call.1} parent=5 // pred_check_branch
        %259 = sbr.rel (%p256) target = $region44
      $region43: #{tpu_custom_call.1} parent=5 // pred_region
        %s260 = ssub.s32 %s16, 1
        // Predicated region
        $region45: #{tpu_custom_call.1} parent=43 // pred_check
          %p261 = pneg %p143
        $region46: #{tpu_custom_call.1} parent=43 // pred_check_branch
          %263 = sbr.rel (%p261) target = $region48
        $region47: #{tpu_custom_call.1} parent=43 // pred_region
          %265 = dma.done [#allocation3], 1024
        $region48: #{tpu_custom_call.1} parent=43 // pred_fallthru
          _
        %p266 = scmp.lt.s32.totalorder %s25, 1
        %s267 = scalar_select %p266, %s25, 1
        %s268 = smul.addr %s267, 8
        %s269 = scalar_lea.vmem %s0, %s268
        %p270 = pneg %p54
        %p271 = pneg %p51
        %p272 = pneg %p75
        %p273 = pneg %p72
        %p274 = pneg %p96
        %p275 = pneg %p93
        %p276 = pneg %p117
        %p277 = pneg %p114
        %p278 = pneg %p143
        %p279 = pneg %p140
        %p280 = scmp.lt.s32.totalorder %s26, 0
        %s281 = scalar_select %p280, %s26, 0
        %s282 = scalar_lea.vmem %s5, %s281
        %p283 = pneg %p169
        %p284 = pneg %p166
        %p285 = pneg %p197
        %p286 = pneg %p194
        %s287 = sand.u32 %s184, 1
        %s288 = scalar_lea.sflag [#allocation4], %s287
        %s289 = sand.u32 %s184, 1
        %s290 = smul.addr %s289, 8
        %s291 = scalar_lea.vmem [#allocation5], %s290
        %p292 = scmp.lt.s32.totalorder %s25, 1
        %s293 = scalar_select %p292, %s25, 1
        %s294 = smul.addr %s293, 8
        %s295 = scalar_lea.vmem %s0, %s294
        %p296 = scmp.lt.s32.totalorder %s26, 0
        %s297 = scalar_select %p296, %s26, 0
        %s298 = scalar_lea.vmem %s5, %s297
        %v300 = vld [vmem:[%s1] sm:$0x1]
        %v301 = vld [vmem:[%s1 + $0x1] sm:$0x1]
        %v302 = vld [vmem:[%s295] sm:$0xff]
        %304 = vset.pattern.permute.xlu0 0
        %305 = vperm.xlu0 %304, %v302
        %v306 = vpop.permute.xlu0 %305
        %v308 = vperm.slane %v300, 0
        %v309 = vmul.f32 %v306, %v308
        %v310 = vperm.slane %v301, 0
        %v311 = vadd.f32 %v309, %v310
        %v312 = vand.u32 2147483647, %v311
        %vm313 = vcmp.le.f32.partialorder %v312, 0.7853982
        %vm314 = vcmp.lt.s32.totalorder %v311, 0
        %v315 = vand.u32 %v311, 2139095040
        %v316 = vshrl.u32 %v315, 23
        %v317 = vsub.s32 %v316, 127
        %v318 = vand.u32 2147483647, %v311
        %v319 = vand.u32 %v318, 8388607
        %v320 = vor.u32 %v319, 8388608
        %v321 = vsub.s32 0, %v320
        %v322 = vadd.s32 %v317, 1
        %vm323 = vcmp.gt.s32.totalorder %v322, 0
        %v324 = vsel %vm323, %v322, 0
        %v325 = vshrl.u32 %v324, 5
        %v326 = vand.u32 %v324, 31
        %v327 = vsub.s32 32, %v326
        %v328 = vshrl.u32 683565275, %v327
        %v329 = vshll.u32 683565275, %v326
        %v330 = vshrl.u32 2475754826, %v327
        %v331 = vor.u32 %v329, %v330
        %v332 = vshll.u32 2475754826, %v326
        %v333 = vshrl.u32 2131351028, %v327
        %v334 = vor.u32 %v332, %v333
        %v335 = vshll.u32 2131351028, %v326
        %v336 = vshrl.u32 2102212464, %v327
        %v337 = vor.u32 %v335, %v336
        %v338 = vshll.u32 2102212464, %v326
        %v339 = vshrl.u32 920167782, %v327
        %v340 = vor.u32 %v338, %v339
        %v341 = vshll.u32 920167782, %v326
        %v342 = vshrl.u32 1326507024, %v327
        %v343 = vor.u32 %v341, %v342
        %vm344 = vcmp.lt.s32.totalorder %v325, 1
        %vm345 = vcmp.lt.s32.totalorder %v325, 2
        %vm346 = vcmp.lt.s32.totalorder %v325, 3
        %vm347 = vcmp.lt.s32.totalorder %v325, 4
        %v348 = vsel %vm344, %v328, %v331
        %v349 = vsel %vm347, %v337, 2102212464
        %v350 = vsel %vm346, %v334, %v349
        %v351 = vsel %vm345, %v348, %v350
        %v352 = vsel %vm344, %v331, %v334
        %v353 = vsel %vm347, %v340, 920167782
        %v354 = vsel %vm346, %v337, %v353
        %v355 = vsel %vm345, %v352, %v354
        %v356 = vsel %vm344, %v334, %v337
        %v357 = vsel %vm347, %v343, 1326507024
        %v358 = vsel %vm346, %v340, %v357
        %v359 = vsel %vm345, %v356, %v358
        %v360 = vshll.u32 %v320, 8
        %v361 = vand.u32 %v360, 65535
        %v362 = vshrl.u32 %v360, 16
        %v363 = vand.u32 %v359, 65535
        %v364 = vshrl.u32 %v359, 16
        %v365 = vmul.u32 %v361, %v363
        %v366 = vmul.u32 %v361, %v364
        %v367 = vmul.u32 %v362, %v363
        %v368 = vmul.u32 %v362, %v364
        %v369 = vshll.u32 %v366, 16
        %v370 = vshrl.u32 %v366, 16
        %v371 = vshll.u32 %v367, 16
        %v372 = vshrl.u32 %v367, 16
        %vm373 = vc.u32 %v365, %v369
        %v374 = vsel %vm373, 1, 0
        %v375 = vadd.s32 %v365, %v369
        %v376 = vadd.s32 %v368, %v374
        %vm377 = vc.u32 %v375, %v371
        %v378 = vsel %vm377, 1, 0
        %v379 = vadd.s32 %v375, %v371
        %v380 = vadd.s32 %v376, %v378
        %v381 = vadd.s32 %v380, %v370
        %v382 = vadd.s32 %v381, %v372
        %v383 = vand.u32 %v360, 65535
        %v384 = vshrl.u32 %v360, 16
        %v385 = vand.u32 %v355, 65535
        %v386 = vshrl.u32 %v355, 16
        %v387 = vmul.u32 %v383, %v385
        %v388 = vmul.u32 %v383, %v386
        %v389 = vmul.u32 %v384, %v385
        %v390 = vmul.u32 %v384, %v386
        %v391 = vshll.u32 %v388, 16
        %v392 = vshrl.u32 %v388, 16
        %v393 = vshll.u32 %v389, 16
        %v394 = vshrl.u32 %v389, 16
        %vm395 = vc.u32 %v387, %v391
        %v396 = vsel %vm395, 1, 0
        %v397 = vadd.s32 %v387, %v391
        %v398 = vadd.s32 %v390, %v396
        %vm399 = vc.u32 %v397, %v393
        %v400 = vsel %vm399, 1, 0
        %v401 = vadd.s32 %v397, %v393
        %v402 = vadd.s32 %v398, %v400
        %v403 = vadd.s32 %v402, %v392
        %v404 = vadd.s32 %v403, %v394
        %v405 = vmul.u32 %v360, %v351
        %v406 = vadd.s32 %v382, %v401
        %vm407 = vc.u32 %v382, %v401
        %v408 = vadd.s32 %v404, 1
        %v409 = vsel %vm407, %v408, %v404
        %v410 = vadd.s32 %v405, %v409
        %v411 = vadd.s32 %v410, 536870912
        %v412 = vshrl.u32 %v411, 30
        %v413 = vshll.u32 %v412, 30
        %v414 = vsub.s32 %v410, %v413
        %vm415 = vcmp.lt.s32.totalorder %v414, 0
        %v416 = vsub.s32 0, %v414
        %v417 = vsel %vm415, %v416, %v414
        %v418 = vclz %v417
        %v419 = vsub.s32 %v418, 2
        %vm420 = vcmp.gt.s32.totalorder 0, %v419
        %v421 = vsel %vm420, 0, %v419
        %v422 = vsub.s32 32, %v421
        %v423 = vshll.u32 %v414, %v421
        %v424 = vshrl.u32 %v406, %v422
        %v425 = vor.u32 %v423, %v424
        %v426 = vsub.s32 4294967266, %v421
        %v427 = vadd.s32 %v426, 127
        %v428 = vshll.u32 %v427, 23
        %v429 = vor.u32 4788187, %v428
        %v430 = vand.u32 2147483647, %v429
        %v432 = vcvt.s32.f32 %v425
        %v433 = vmul.f32 %v432, %v430
        %v434 = vxor.u32 %v433, 2147483648
        %v435 = vsel %vm314, %v434, %v433
        %v436 = vsub.s32 4, %v412
        %v437 = vsel %vm314, %v436, %v412
        %v438 = vsel %vm313, %v311, %v435
        %v439 = vsel %vm313, 0, %v437
        %v440 = vmul.f32 %v438, %v438
        %v441 = vmul.f32 %v440, -0.001358992
        %v442 = vadd.f32 %v441, 0.041655596
        %v443 = vmul.f32 %v440, %v442
        %v444 = vadd.f32 %v443, -0.4999988
        %v445 = vmul.f32 %v440, %v444
        %v446 = vadd.f32 1.0, %v445
        %v447 = vmul.f32 %v438, %v438
        %v448 = vmul.f32 %v447, -0.00019511016
        %v449 = vadd.f32 %v448, 0.008332121
        %v450 = vmul.f32 %v447, %v449
        %v451 = vadd.f32 %v450, -0.16666654
        %v452 = vmul.f32 %v447, %v451
        %v453 = vadd.f32 %v452, 1.0
        %v454 = vmul.f32 %v453, %v438
        %vm455 = vweird.f32 %v311
        %v456 = vadd.s32 %v439, 3
        %v457 = vand.u32 %v456, 3
        %vm458 = vcmp.lt.s32.totalorder %v457, 2
        %vm459 = vcmp.eq.s32.totalorder %v457, 0
        %v460 = vxor.u32 %v454, 2147483648
        %v461 = vsel %vm459, %v446, %v460
        %vm462 = vcmp.eq.s32.totalorder %v457, 2
        %v463 = vxor.u32 %v446, 2147483648
        %v464 = vsel %vm462, %v463, %v454
        %v465 = vsel %vm458, %v461, %v464
        %v466 = vsel %vm455, nan, %v465
        %v467 = vpack.c.bf16 %v466, %v466
        %v468 = vld [vmem:[%s2] sm:$0xf]
        %v469 = vld [vmem:[%s2 + $0x4] sm:$0xf]
        %v470 = vld [vmem:[%s2 + $0x8] sm:$0xf]
        %v471 = vld [vmem:[%s2 + $0xc] sm:$0xf]
        %v472 = vld [vmem:[%s3] sm:$0x1]
        %v474 = vperm.slane %v472, 0
        %v480 = vunpack.c.l.b16 %v468
        %v481 = vunpack.c.l.b16 %v469
        %v482 = vunpack.c.l.b16 %v470
        %v483 = vunpack.c.l.b16 %v471
        %v484 = vpack.c.b16 %v481, %v480
        %v485 = vpack.c.b16 %v483, %v482
        %vm488 = vcmask 261120
        %v490 = vsel %vm488, %v467, 0
        %492 = vmatpush.bf16.msra.mxu0 0
        %493 = vmatpush.bf16.msra.mxu0 0
        %494 = vmatpush.bf16.msra.mxu0 0
        %495 = vmatpush.bf16.msra.mxu0 0
        %496 = vmatpush.bf16.msra.mxu0 0
        %497 = vmatpush.bf16.msra.mxu0 0
        %498 = vmatpush.bf16.msra.mxu0 %v485
        %499 = vmatpush.bf16.msra.mxu0 %v484
        %500 = vmatmul.bf16.gmra.mxu0 %v490
        %v501 = vpop.f32.mrf.mxu0
        %v502 = vadd.f32 %v474, %v501
        %v503 = vpop.f32.mrf.mxu0
        %504 = vdwg.mxu0
        %v505 = vmul.f32 %v502, 0.01
        %v506 = vmax.f32 %v502, %v505
        %v507 = vpack.c.bf16 %v506, %v506
        %v508 = vld [vmem:[#allocation2] sm:$0xf]
        %v509 = vld [vmem:[#allocation2 + $0x4] sm:$0xf]
        %v510 = vld [vmem:[#allocation2 + $0x8] sm:$0xf]
        %v511 = vld [vmem:[#allocation2 + $0xc] sm:$0xf]
        %v512 = vld [vmem:[#allocation2 + $0x10] sm:$0xf]
        %v513 = vld [vmem:[#allocation2 + $0x14] sm:$0xf]
        %v514 = vld [vmem:[#allocation2 + $0x18] sm:$0xf]
        %v515 = vld [vmem:[#allocation2 + $0x1c] sm:$0xf]
        %v516 = vld [vmem:[#allocation2 + $0x20] sm:$0xf]
        %v517 = vld [vmem:[#allocation2 + $0x24] sm:$0xf]
        %v518 = vld [vmem:[#allocation2 + $0x28] sm:$0xf]
        %v519 = vld [vmem:[#allocation2 + $0x2c] sm:$0xf]
        %v520 = vld [vmem:[#allocation2 + $0x30] sm:$0xf]
        %v521 = vld [vmem:[#allocation2 + $0x34] sm:$0xf]
        %v522 = vld [vmem:[#allocation2 + $0x38] sm:$0xf]
        %v523 = vld [vmem:[#allocation2 + $0x3c] sm:$0xf]
        %v524 = vld [vmem:[%s298] sm:$0x1]
        %v526 = vperm.slane %v524, 0
        %v544 = vunpack.c.l.b16 %v508
        %v545 = vunpack.c.l.b16 %v509
        %v546 = vunpack.c.l.b16 %v510
        %v547 = vunpack.c.l.b16 %v511
        %v548 = vunpack.c.l.b16 %v512
        %v549 = vunpack.c.l.b16 %v513
        %v550 = vunpack.c.l.b16 %v514
        %v551 = vunpack.c.l.b16 %v515
        %v552 = vunpack.c.l.b16 %v516
        %v553 = vunpack.c.l.b16 %v517
        %v554 = vunpack.c.l.b16 %v518
        %v555 = vunpack.c.l.b16 %v519
        %v556 = vunpack.c.l.b16 %v520
        %v557 = vunpack.c.l.b16 %v521
        %v558 = vunpack.c.l.b16 %v522
        %v559 = vunpack.c.l.b16 %v523
        %v560 = vpack.c.b16 %v545, %v544
        %v561 = vpack.c.b16 %v547, %v546
        %v562 = vpack.c.b16 %v549, %v548
        %v563 = vpack.c.b16 %v551, %v550
        %v564 = vpack.c.b16 %v553, %v552
        %v565 = vpack.c.b16 %v555, %v554
        %v566 = vpack.c.b16 %v557, %v556
        %v567 = vpack.c.b16 %v559, %v558
        %576 = vmatpush.bf16.msra.mxu0 %v567
        %577 = vmatpush.bf16.msra.mxu0 %v566
        %578 = vmatpush.bf16.msra.mxu0 %v565
        %579 = vmatpush.bf16.msra.mxu0 %v564
        %580 = vmatpush.bf16.msra.mxu0 %v563
        %581 = vmatpush.bf16.msra.mxu0 %v562
        %582 = vmatpush.bf16.msra.mxu0 %v561
        %583 = vmatpush.bf16.msra.mxu0 %v560
        %584 = vmatmul.bf16.gmra.mxu0 %v507
        %v585 = vpop.f32.mrf.mxu0
        %v586 = vadd.f32 %v526, %v585
        %v587 = vpop.f32.mrf.mxu0
        %588 = vdwg.mxu0
        %589 = vst [vmem:[%s291] sm:$0xff] %v586
        %s590 = sand.u32 %s184, 1
        %s591 = scalar_lea.sflag [#allocation4], %s590
        %s592 = sand.u32 %s184, 1
        %s593 = smul.addr %s592, 8
        %s594 = scalar_lea.vmem [#allocation5], %s593
        // Predicated region
        $region49: #{tpu_custom_call.1} parent=43 // pred_check
          %p595 = pneg %p194
        $region50: #{tpu_custom_call.1} parent=43 // pred_check_branch
          %597 = sbr.rel (%p595) target = $region52
        $region51: #{tpu_custom_call.1} parent=43 // pred_region
          %599 = vsyncadd %s591, 0
          %s600 = sadd.s32 %s26, %s25
          %s601 = smul.addr %s600, 8
          %s602 = scalar_lea.hbm %s6, %s601
          %s604 = sshll.u32 %s594, 4
          %s605 = int_to_ptr.vmem [resolvable:$true] %s604
          %s606 = sshll.u32 %s602, 4
          %s607 = int_to_ptr.hbm [resolvable:$true] %s606
          %609 = dma.vmem_to_hbm [thread:$0]  %s605, 128, %s607, %s591
        $region52: #{tpu_custom_call.1} parent=43 // pred_fallthru
          _
      $region44: #{tpu_custom_call.1} parent=5 // pred_fallthru
        _
      %p610 = scmp.le.s32.totalorder 2, %s16
      // Predicated region
      $region53: #{tpu_custom_call.1} parent=5 // pred_check
        %p611 = pneg %p610
      $region54: #{tpu_custom_call.1} parent=5 // pred_check_branch
        %613 = sbr.rel (%p611) target = $region56
      $region55: #{tpu_custom_call.1} parent=5 // pred_region
        %s614 = ssub.s32 %s16, 2
        // Predicated region
        $region57: #{tpu_custom_call.1} parent=55 // pred_check
          %p615 = pneg %p200
        $region58: #{tpu_custom_call.1} parent=55 // pred_check_branch
          %617 = sbr.rel (%p615) target = $region60
        $region59: #{tpu_custom_call.1} parent=55 // pred_region
          %s618 = sand.u32 %s185, 1
          %s619 = scalar_lea.sflag [#allocation4], %s618
          %s620 = sand.u32 %s185, 1
          %s621 = smul.addr %s620, 8
          %s622 = scalar_lea.vmem [#allocation5], %s621
          %624 = dma.done %s619, 128
        $region60: #{tpu_custom_call.1} parent=55 // pred_fallthru
          _
      $region56: #{tpu_custom_call.1} parent=5 // pred_fallthru
        _
    $region6: #{tpu_custom_call.1} parent=1 // loop_footer
      %s20 = sadd.s32 1, %s16
    $region7: #{tpu_custom_call.1} parent=1 // loop_footer_branch
      %15 = sbr.rel target = $region3
    $region8: #{tpu_custom_call.1} parent=1 // loop_exit
      _
    %625 = vsyncpa [#allocation3], 1
    %s626 = scalar_lea.sflag [#allocation3], 1
    %627 = vsyncpa %s626, 1
    %628 = vsyncpa [#allocation4], 1
    %s629 = scalar_lea.sflag [#allocation4], 1
    %630 = vsyncpa %s629, 1

</llo_original>
